<compile_context>
chip_gen: v7x
topology: tpu7x:2x2x1
jax: 0.10.0
libtpu: 0.0.40
codegen_flags: <defaults>
</compile_context>

<pallas_src>
import functools

import jax
import jax.numpy as jnp
from jax.experimental import pallas as pl
from jax.experimental.pallas import tpu as pltpu


def _gce_kernel(logits_ref, target_ref, out_ref, *, thresh, q, n_total):
    x = logits_ref[...].astype(jnp.float32)          # (TILE_N, C)
    tn, c = x.shape

    # Row-validity mask for the ragged last block (no host-side padding).
    base = pl.program_id(0) * tn
    row = base + jax.lax.broadcasted_iota(jnp.int32, (tn, 1), 0)
    valid = row < n_total                            # (TILE_N, 1) bool

    # Neutralize garbage beyond N before any reduction (could be NaN/Inf).
    x = jnp.where(valid, x, 0.0)

    # Numerically-stable exp; skip the full softmax normalization -- only the
    # target-class probability is needed: p_t = exp(x_t - m) / sum(exp(x - m)).
    m = jnp.max(x, axis=-1, keepdims=True)
    e = jnp.exp(x - m)                               # the one big EUP pass
    denom = jnp.sum(e, axis=-1, keepdims=True)       # (TILE_N, 1)

    # Gather exp(target logit) via a one-hot compare (no dynamic gather on TPU).
    col = jax.lax.broadcasted_iota(jnp.int32, (tn, c), 1)
    tgt = target_ref[...]                            # (TILE_N, 1) int32
    e_t = jnp.sum(jnp.where(col == tgt, e, 0.0), axis=-1, keepdims=True)

    p_t = e_t / denom                                # (TILE_N, 1): exact divides

    # Threshold mask, AND'd with row validity so out-of-range rows never count
    # (robust even for thresh <= 0).
    w = jnp.logical_and(p_t > thresh, valid)
    # p_t ** q via exp(q * log(p_t)); clamp so log(0) never produces -inf.
    p_pow_q = jnp.exp(q * jnp.log(jnp.maximum(p_t, 1e-30)))
    loss_i = (1.0 - p_pow_q) / q                     # (TILE_N, 1)

    num = jnp.sum(jnp.where(w, loss_i, 0.0))         # f32 scalar
    cnt = jnp.sum(w.astype(jnp.float32))             # f32 scalar

    # Full-vreg (8, 128) partial -> unmasked store.
    # sublane 0 = num, sublane 1 = cnt, rest zero.
    sub = jax.lax.broadcasted_iota(jnp.int32, (8, 128), 0)
    out_ref[0] = jnp.where(sub == 0, num, jnp.where(sub == 1, cnt, 0.0))


def _vmem_capacity_bytes():
    try:
        return int(pltpu.get_tpu_info().vmem_capacity_bytes)
    except Exception:
        return 64 << 20  # v7x per-TC: the smallest of current generations


def _sublane_multiple(itemsize):
    return {4: 8, 2: 16, 1: 32}.get(int(itemsize), 8)


def _choose_tile_n(n, c, itemsize):
    """Bytes-based block sizing with a per-generation VMEM budget.

    Returns (tile_n, vmem_limit_bytes).
    """
    sub = _sublane_multiple(itemsize)

    vmem_cap = _vmem_capacity_bytes()
    vmem_limit = min(int(0.75 * vmem_cap), 96 << 20)
    budget = int(0.8 * vmem_limit)

    # VMEM per sample row: double-buffered native-dtype input block plus ~5
    # f32-sized in-kernel temporaries (x, e, one-hot select, scratch).
    per_row = c * (2 * int(itemsize) + 5 * 4)

    tile = max(1, budget // per_row)
    # ~8 MiB of logits per block is plenty to hit the HBM streaming roofline.
    tile = min(tile, max(1, (8 << 20) // (c * int(itemsize))))
    # Keep >= ~8 grid steps so v7x's 2 TensorCores both get work and the
    # pipeline has blocks to overlap (no effect on v5e/v6e correctness).
    tile = min(tile, pl.cdiv(n, 8))
    tile = min(tile, n)
    # dtype-aware sublane rounding (bf16 packs 16 rows per sublane group).
    tile = max(sub, (tile // sub) * sub)

    # Very large C: make sure the scoped-VMEM limit covers the minimum tile.
    footprint = tile * per_row + (1 << 20)
    if footprint > budget:
        vmem_limit = min(max(vmem_limit, footprint + (2 << 20)),
                         int(0.9 * vmem_cap))
    return tile, vmem_limit


def gce_loss(logits, target, thresh=0.5, q=0.7, tile_n=None):
    """logits: (N, C) float; target: (N,) int. Returns scalar float32 loss."""
    n, c = logits.shape
    itemsize = jnp.dtype(logits.dtype).itemsize
    auto_tile, vmem_limit = _choose_tile_n(n, c, itemsize)
    sub = _sublane_multiple(itemsize)
    if tile_n is None:
        tile_n = auto_tile
    else:
        tile_n = max(sub, (int(tile_n) // sub) * sub)

    num_tiles = pl.cdiv(n, tile_n)

    # Targets reshaped to (N, 1) int32; no padding of logits or targets --
    # the ragged last block is masked by row index inside the kernel.
    target2d = target.astype(jnp.int32).reshape(n, 1)

    partials = pl.pallas_call(
        functools.partial(_gce_kernel, thresh=float(thresh), q=float(q),
                          n_total=int(n)),
        out_shape=jax.ShapeDtypeStruct((num_tiles, 8, 128), jnp.float32),
        grid=(num_tiles,),
        in_specs=[
            pl.BlockSpec((tile_n, c), lambda i: (i, 0)),
            pl.BlockSpec((tile_n, 1), lambda i: (i, 0)),
        ],
        out_specs=pl.BlockSpec((1, 8, 128), lambda i: (i, 0, 0)),
        compiler_params=pltpu.CompilerParams(
            dimension_semantics=("parallel",),
            vmem_limit_bytes=int(vmem_limit)),
    )(logits, target2d)

    num = jnp.sum(partials[:, 0, 0])
    cnt = jnp.sum(partials[:, 1, 0])
    # Masked mean (NaN if no sample passes the threshold, matching torch's
    # mean over an empty selection).
    return num / cnt


def _gce_loss_ref(logits, target, thresh=0.5, q=0.7):
    """Plain-JAX reference mirroring the PyTorch module (q != 0, C > 1)."""
    p = jax.nn.softmax(logits.astype(jnp.float32), axis=-1)
    p_t = jnp.take_along_axis(p, target[:, None].astype(jnp.int32), axis=-1)
    w = p_t > thresh
    loss_i = (1.0 - p_t ** q) / q
    return jnp.sum(jnp.where(w, loss_i, 0.0)) / jnp.sum(w.astype(jnp.float32))


if __name__ == "__main__":
    key = jax.random.PRNGKey(0)

    def make_case(case_key, n, c, dtype=jnp.float32):
        k1, k2 = jax.random.split(case_key)
        logits = jax.random.normal(k1, (n, c), dtype=jnp.float32)
        target = jax.random.randint(k2, (n,), 0, c, dtype=jnp.int32)
        # boost the target logit for half the samples so the confidence
        # threshold (p_t > 0.5) is exceeded by a non-empty subset
        boost = jnp.where(jnp.arange(n) % 2 == 0, 6.0, 0.0)
        logits = logits.at[jnp.arange(n), target].add(boost)
        return logits.astype(dtype), target

    k_a, k_b, k_c = jax.random.split(key, 3)

    # Case 1: N divisible by the auto-chosen tile (multi-step parallel grid).
    logits, target = make_case(k_a, 64, 16)
    loss = jax.block_until_ready(gce_loss(logits, target))
    ref = _gce_loss_ref(logits, target)
    assert jnp.allclose(loss, ref, rtol=1e-5, atol=1e-6), (loss, ref)

    # Case 2: N not a multiple of the tile (exercises the in-kernel ragged
    # last-block masking -- no host-side pad of logits).
    logits, target = make_case(k_b, 50, 24)
    loss = jax.block_until_ready(gce_loss(logits, target, tile_n=16))
    ref = _gce_loss_ref(logits, target)
    assert jnp.allclose(loss, ref, rtol=1e-5, atol=1e-6), (loss, ref)

    # Case 3: bf16 logits streamed in native dtype (dtype-aware 16-row tiles).
    logits, target = make_case(k_c, 72, 32, dtype=jnp.bfloat16)
    loss = jax.block_until_ready(gce_loss(logits, target))
    ref = _gce_loss_ref(logits.astype(jnp.float32), target)
    assert jnp.allclose(loss, ref, rtol=1e-4, atol=1e-5), (loss, ref)

    print("KERNEL_OK")
</pallas_src>

<mosaic_0001>
module attributes {stable_mosaic.version = 11 : i64} {
  func.func @_gce_kernel(%arg0: i32, %arg1: memref<8x16xf32, #tpu.memory_space<vmem>>, %arg2: memref<8x1xi32, #tpu.memory_space<vmem>>, %arg3: memref<1x8x128xf32, #tpu.memory_space<vmem>>) attributes {dimension_semantics = [#tpu.dimension_semantics<parallel>], iteration_bounds = array<i64: 8>, scalar_prefetch = 0 : i64, scratch_operands = 0 : i64, tpu.core_type = #tpu.core_type<tc>, window_params = [{transform_indices = @transform_0, window_bounds = array<i64: 8, 16>}, {transform_indices = @transform_1, window_bounds = array<i64: 8, 1>}, {transform_indices = @transform_2, window_bounds = array<i64: 1, 8, 128>}]} {
    %c0 = arith.constant 0 : index
    %c0_0 = arith.constant 0 : index
    %0 = vector.load %arg1[%c0, %c0_0] : memref<8x16xf32, #tpu.memory_space<vmem>>, vector<8x16xf32>
    %c8_i32 = arith.constant 8 : i32
    %1 = arith.muli %arg0, %c8_i32 : i32
    %2 = tpu.iota {dimensions = array<i32: 0>} : vector<8x1xi32>
    %3 = vector.broadcast %1 : i32 to vector<8x1xi32>
    %4 = arith.addi %3, %2 : vector<8x1xi32>
    %c64_i32 = arith.constant 64 : i32
    %5 = vector.broadcast %c64_i32 : i32 to vector<8x1xi32>
    %6 = arith.cmpi slt, %4, %5 : vector<8x1xi32>
    %cst = arith.constant 0.000000e+00 : f32
    %7 = vector.shape_cast %6 : vector<8x1xi1> to vector<8x1xi1>
    %8 = vector.broadcast %7 : vector<8x1xi1> to vector<8x16xi1>
    %9 = vector.broadcast %cst : f32 to vector<8x16xf32>
    %10 = arith.select %8, %0, %9 : vector<8x16xi1>, vector<8x16xf32>
    %cst_1 = arith.constant dense<0xFF800000> : vector<8xf32>
    %11 = vector.multi_reduction <maximumf>, %10, %cst_1 [1] : vector<8x16xf32> to vector<8xf32>
    %12 = vector.shape_cast %11 : vector<8xf32> to vector<8x1xf32>
    %13 = vector.broadcast %12 : vector<8x1xf32> to vector<8x16xf32>
    %14 = arith.subf %10, %13 : vector<8x16xf32>
    %15 = math.exp %14 : vector<8x16xf32>
    %cst_2 = arith.constant dense<0.000000e+00> : vector<8xf32>
    %16 = vector.multi_reduction <add>, %15, %cst_2 [1] : vector<8x16xf32> to vector<8xf32>
    %17 = vector.shape_cast %16 : vector<8xf32> to vector<8x1xf32>
    %18 = tpu.iota {dimensions = array<i32: 1>} : vector<8x16xi32>
    %c0_3 = arith.constant 0 : index
    %c0_4 = arith.constant 0 : index
    %19 = vector.load %arg2[%c0_3, %c0_4] : memref<8x1xi32, #tpu.memory_space<vmem>>, vector<8x1xi32>
    %20 = vector.broadcast %19 : vector<8x1xi32> to vector<8x16xi32>
    %21 = arith.cmpi eq, %18, %20 : vector<8x16xi32>
    %cst_5 = arith.constant 0.000000e+00 : f32
    %22 = vector.broadcast %cst_5 : f32 to vector<8x16xf32>
    %23 = arith.select %21, %15, %22 : vector<8x16xi1>, vector<8x16xf32>
    %cst_6 = arith.constant dense<0.000000e+00> : vector<8xf32>
    %24 = vector.multi_reduction <add>, %23, %cst_6 [1] : vector<8x16xf32> to vector<8xf32>
    %25 = vector.shape_cast %24 : vector<8xf32> to vector<8x1xf32>
    %26 = arith.divf %25, %17 : vector<8x1xf32>
    %cst_7 = arith.constant 5.000000e-01 : f32
    %27 = vector.broadcast %cst_7 : f32 to vector<8x1xf32>
    %28 = arith.cmpf ogt, %26, %27 : vector<8x1xf32>
    %29 = arith.andi %28, %6 : vector<8x1xi1>
    %cst_8 = arith.constant 1.000000e-30 : f32
    %30 = vector.broadcast %cst_8 : f32 to vector<8x1xf32>
    %31 = arith.maximumf %26, %30 : vector<8x1xf32>
    %32 = math.log %31 : vector<8x1xf32>
    %cst_9 = arith.constant 0.699999988 : f32
    %33 = vector.broadcast %cst_9 : f32 to vector<8x1xf32>
    %34 = arith.mulf %33, %32 : vector<8x1xf32>
    %35 = math.exp %34 : vector<8x1xf32>
    %cst_10 = arith.constant 1.000000e+00 : f32
    %36 = vector.broadcast %cst_10 : f32 to vector<8x1xf32>
    %37 = arith.subf %36, %35 : vector<8x1xf32>
    %cst_11 = arith.constant 0.699999988 : f32
    %38 = vector.broadcast %cst_11 : f32 to vector<8x1xf32>
    %39 = arith.divf %37, %38 : vector<8x1xf32>
    %cst_12 = arith.constant 0.000000e+00 : f32
    %40 = vector.broadcast %cst_12 : f32 to vector<8x1xf32>
    %41 = arith.select %29, %39, %40 : vector<8x1xi1>, vector<8x1xf32>
    %42 = vector.shape_cast %41 : vector<8x1xf32> to vector<1x8x1xf32>
    %cst_13 = arith.constant dense<0.000000e+00> : vector<1xf32>
    %43 = vector.multi_reduction <add>, %42, %cst_13 [1, 2] : vector<1x8x1xf32> to vector<1xf32>
    %44 = vector.shape_cast %43 : vector<1xf32> to vector<1x1x1xf32>
    %45 = vector.extract %44[0, 0, 0] : f32 from vector<1x1x1xf32>
    %46 = arith.extui %29 : vector<8x1xi1> to vector<8x1xi32>
    %47 = arith.sitofp %46 : vector<8x1xi32> to vector<8x1xf32>
    %48 = vector.shape_cast %47 : vector<8x1xf32> to vector<1x8x1xf32>
    %cst_14 = arith.constant dense<0.000000e+00> : vector<1xf32>
    %49 = vector.multi_reduction <add>, %48, %cst_14 [1, 2] : vector<1x8x1xf32> to vector<1xf32>
    %50 = vector.shape_cast %49 : vector<1xf32> to vector<1x1x1xf32>
    %51 = vector.extract %50[0, 0, 0] : f32 from vector<1x1x1xf32>
    %52 = tpu.iota {dimensions = array<i32: 0>} : vector<8x128xi32>
    %c0_i32 = arith.constant 0 : i32
    %53 = vector.broadcast %c0_i32 : i32 to vector<8x128xi32>
    %54 = arith.cmpi eq, %52, %53 : vector<8x128xi32>
    %c1_i32 = arith.constant 1 : i32
    %55 = vector.broadcast %c1_i32 : i32 to vector<8x128xi32>
    %56 = arith.cmpi eq, %52, %55 : vector<8x128xi32>
    %cst_15 = arith.constant 0.000000e+00 : f32
    %57 = vector.broadcast %51 : f32 to vector<8x128xf32>
    %58 = vector.broadcast %cst_15 : f32 to vector<8x128xf32>
    %59 = arith.select %56, %57, %58 : vector<8x128xi1>, vector<8x128xf32>
    %60 = vector.broadcast %45 : f32 to vector<8x128xf32>
    %61 = arith.select %54, %60, %59 : vector<8x128xi1>, vector<8x128xf32>
    %c0_16 = arith.constant 0 : index
    %c0_17 = arith.constant 0 : index
    %c0_18 = arith.constant 0 : index
    %62 = vector.load %arg3[%c0_16, %c0_17, %c0_18] : memref<1x8x128xf32, #tpu.memory_space<vmem>>, vector<1x8x128xf32>
    %63 = vector.shape_cast %62 : vector<1x8x128xf32> to vector<8x128xf32>
    %64 = vector.shape_cast %61 : vector<8x128xf32> to vector<1x8x128xf32>
    tpu.vector_store %arg3[%c0_16, %c0_17, %c0_18], %64 {strides = array<i32>} : memref<1x8x128xf32, #tpu.memory_space<vmem>>, vector<1x8x128xf32>,
    return
  }
  func.func @transform_0(%arg0: i32) -> (i32, i32) {
    %c0_i32 = arith.constant 0 : i32
    %c0_i32_0 = arith.constant 0 : i32
    return %arg0, %c0_i32 : i32, i32
  }
  func.func @transform_1(%arg0: i32) -> (i32, i32) {
    %c0_i32 = arith.constant 0 : i32
    %c0_i32_0 = arith.constant 0 : i32
    return %arg0, %c0_i32 : i32, i32
  }
  func.func @transform_2(%arg0: i32) -> (i32, i32, i32) {
    %c0_i32 = arith.constant 0 : i32
    %c0_i32_0 = arith.constant 0 : i32
    %c0_i32_1 = arith.constant 0 : i32
    return %arg0, %c0_i32, %c0_i32_0 : i32, i32, i32
  }
}

</mosaic_0001>

<llo_original>
// kernel: tpu_custom_call.1
$region0: #{tpu_custom_call.1}
  #allocation0 [shape = 'u32[]', space=smem, size = 0x4, offset = 0x4, fixed_abs, tag = 'smem constant byte address 0x4 - core index']
  #allocation1 [shape = 'u32[144,128]{1,0:T(1,128)}', space=vmem, size = 0x12000, scoped, tag = 'internal scratch']
  %s0 = inlined_call_operand.vmem [shape: f32[64,16], index: 0, kind: input, shape index: {}]
  %s1 = inlined_call_operand.vmem [shape: s32[64,1], index: 1, kind: input, shape index: {}]
  %s2 = inlined_call_operand.hbm [shape: f32[8,8,128], index: 2, kind: output, shape index: {}]
  %s3 = sld [smem:[#allocation0]]
  $region41: #{tpu_custom_call.1} parent=0
    _
  %s5 = ssub.s32 1, %s3
  %s6 = scalar_select 0, %s5, %s3
  $region1: #{tpu_custom_call.1} parent=0
    #allocation2 [shape = 'u8[8192]{0}', space=vmem, size = 0x2000, scoped, tag = 'output window, operand 0']
    #allocation3 [shape = 's32[2]{0}', space=sflag, size = 0x8, scoped, tag = 'scoped memory for tpu_custom_call.1']
    %7 = vsyncpa [#allocation3], 0
    %s8 = scalar_lea.sflag [#allocation3], 1
    %9 = vsyncpa %s8, 0
    loop: start=0, step=1, limit=10
    $region2: #{tpu_custom_call.1} parent=1 // loop_pre_header
      _
    $region3: #{tpu_custom_call.1} parent=1 // loop_header
      %s11 = sphi 0, %s15
      %p12 = scmp.ge.s32.totalorder %s11, 10
      %s21 = sphi 0, %s23
      %s24 = sphi 0, %s21
      %s25 = sphi 0, %s24
      %s41 = sphi 0, %s25
      %s47 = sphi 0, %s49
      %s50 = sphi 0, %s47
      %s51 = sphi 0, %s50
      %s67 = sphi 0, %s51
      %s73 = sphi 0, %s75
      %s76 = sphi 0, %s73
      %s77 = sphi 0, %s76
      %s93 = sphi 0, %s77
    $region4: #{tpu_custom_call.1} parent=1 // loop_header_branch
      %14 = sbr.rel (%p12) target = $region8
    $region5: #{tpu_custom_call.1} parent=1 // loop_body
      %s16 = ssub.s32 %s11, 1
      %s17 = ssub.s32 %s11, 2
      %s18 = sadd.s32 %s11, 1
      %s19 = ssub.s32 %s11, %s18
      %p20 = scmp.eq.s32.totalorder %s19, 0
      %s22 = sadd.s32 %s21, 1
      %s23 = scalar_select %p20, %s21, %s22
      %p26 = pneg %p20
      %p27 = scmp.eq.s32.totalorder %s11, 7
      %p28 = por %p26, %p27
      %p29 = scmp.ne.s32.totalorder %s21, %s24
      %p30 = scmp.eq.s32.totalorder %s11, 0
      %p31 = por %p29, %p30
      %p32 = scmp.ne.s32.totalorder %s21, %s24
      %p33 = scmp.eq.s32.totalorder %s16, 7
      %p34 = por %p32, %p33
      %p35 = scmp.ne.s32.totalorder %s24, %s25
      %p36 = scmp.eq.s32.totalorder %s16, 0
      %p37 = por %p35, %p36
      %p38 = scmp.ne.s32.totalorder %s24, %s25
      %p39 = scmp.eq.s32.totalorder %s17, 7
      %p40 = por %p38, %p39
      %p42 = scmp.ne.s32.totalorder %s25, %s41
      %p43 = scmp.eq.s32.totalorder %s17, 0
      %p44 = por %p42, %p43
      %s45 = ssub.s32 %s11, %s18
      %p46 = scmp.eq.s32.totalorder %s45, 0
      %s48 = sadd.s32 %s47, 1
      %s49 = scalar_select %p46, %s47, %s48
      %p52 = pneg %p46
      %p53 = scmp.eq.s32.totalorder %s11, 7
      %p54 = por %p52, %p53
      %p55 = scmp.ne.s32.totalorder %s47, %s50
      %p56 = scmp.eq.s32.totalorder %s11, 0
      %p57 = por %p55, %p56
      %p58 = scmp.ne.s32.totalorder %s47, %s50
      %p59 = scmp.eq.s32.totalorder %s16, 7
      %p60 = por %p58, %p59
      %p61 = scmp.ne.s32.totalorder %s50, %s51
      %p62 = scmp.eq.s32.totalorder %s16, 0
      %p63 = por %p61, %p62
      %p64 = scmp.ne.s32.totalorder %s50, %s51
      %p65 = scmp.eq.s32.totalorder %s17, 7
      %p66 = por %p64, %p65
      %p68 = scmp.ne.s32.totalorder %s51, %s67
      %p69 = scmp.eq.s32.totalorder %s17, 0
      %p70 = por %p68, %p69
      %s71 = ssub.s32 %s11, %s18
      %p72 = scmp.eq.s32.totalorder %s71, 0
      %s74 = sadd.s32 %s73, 1
      %s75 = scalar_select %p72, %s73, %s74
      %p78 = pneg %p72
      %p79 = scmp.eq.s32.totalorder %s11, 7
      %p80 = por %p78, %p79
      %p81 = scmp.ne.s32.totalorder %s73, %s76
      %p82 = scmp.eq.s32.totalorder %s11, 0
      %p83 = por %p81, %p82
      %p84 = scmp.ne.s32.totalorder %s73, %s76
      %p85 = scmp.eq.s32.totalorder %s16, 7
      %p86 = por %p84, %p85
      %p87 = scmp.ne.s32.totalorder %s76, %s77
      %p88 = scmp.eq.s32.totalorder %s16, 0
      %p89 = por %p87, %p88
      %p90 = scmp.ne.s32.totalorder %s76, %s77
      %p91 = scmp.eq.s32.totalorder %s17, 7
      %p92 = por %p90, %p91
      %p94 = scmp.ne.s32.totalorder %s77, %s93
      %p95 = scmp.eq.s32.totalorder %s17, 0
      %p96 = por %p94, %p95
      %p97 = scmp.le.s32.totalorder 1, %s11
      %p98 = scmp.lt.s32.totalorder %s11, 9
      %p99 = pnand %p97, %p98
      %p100 = pneg %p99
      // Predicated region
      $region9: #{tpu_custom_call.1} parent=5 // pred_check
        _
      $region10: #{tpu_custom_call.1} parent=5 // pred_check_branch
        %102 = sbr.rel (%p99) target = $region12
      $region11: #{tpu_custom_call.1} parent=5 // pred_region
        %s103 = ssub.s32 %s11, 1
      $region12: #{tpu_custom_call.1} parent=5 // pred_fallthru
        _
      %p104 = scmp.lt.s32.totalorder %s11, 8
      // Predicated region
      $region13: #{tpu_custom_call.1} parent=5 // pred_check
        %p105 = pneg %p104
      $region14: #{tpu_custom_call.1} parent=5 // pred_check_branch
        %107 = sbr.rel (%p105) target = $region16
      $region15: #{tpu_custom_call.1} parent=5 // pred_region
        // Predicated region
        $region17: #{tpu_custom_call.1} parent=15 // pred_check
          %p108 = pneg %p31
        $region18: #{tpu_custom_call.1} parent=15 // pred_check_branch
          %110 = sbr.rel (%p108) target = $region20
        $region19: #{tpu_custom_call.1} parent=15 // pred_region
          %p111 = scmp.lt.s32.totalorder %s11, 7
          %s112 = scalar_select %p111, %s11, 7
          %s113 = smul.addr %s112, 8
          %s114 = scalar_lea.vmem %s0, %s113
        $region20: #{tpu_custom_call.1} parent=15 // pred_fallthru
          _
        // Predicated region
        $region21: #{tpu_custom_call.1} parent=15 // pred_check
          %p115 = pneg %p57
        $region22: #{tpu_custom_call.1} parent=15 // pred_check_branch
          %117 = sbr.rel (%p115) target = $region24
        $region23: #{tpu_custom_call.1} parent=15 // pred_region
          %p118 = scmp.lt.s32.totalorder %s11, 7
          %s119 = scalar_select %p118, %s11, 7
          %s120 = smul.addr %s119, 8
          %s121 = scalar_lea.vmem %s1, %s120
        $region24: #{tpu_custom_call.1} parent=15 // pred_fallthru
          _
      $region16: #{tpu_custom_call.1} parent=5 // pred_fallthru
        _
      %p122 = scmp.le.s32.totalorder 1, %s11
      %p123 = scmp.lt.s32.totalorder %s11, 9
      %p124 = pnand %p122, %p123
      %p125 = pneg %p124
      // Predicated region
      $region25: #{tpu_custom_call.1} parent=5 // pred_check
        _
      $region26: #{tpu_custom_call.1} parent=5 // pred_check_branch
        %127 = sbr.rel (%p124) target = $region28
      $region27: #{tpu_custom_call.1} parent=5 // pred_region
        %s128 = ssub.s32 %s11, 1
        %p129 = scmp.lt.s32.totalorder %s16, 7
        %s130 = scalar_select %p129, %s16, 7
        %s131 = smul.addr %s130, 8
        %s132 = scalar_lea.vmem %s0, %s131
        %p133 = pneg %p37
        %p134 = pneg %p34
        %p135 = scmp.lt.s32.totalorder %s16, 7
        %s136 = scalar_select %p135, %s16, 7
        %s137 = smul.addr %s136, 8
        %s138 = scalar_lea.vmem %s1, %s137
        %p139 = pneg %p63
        %p140 = pneg %p60
        %p141 = pneg %p89
        %p142 = pneg %p86
        %s143 = sand.u32 %s76, 1
        %s144 = scalar_lea.sflag [#allocation3], %s143
        %s145 = sand.u32 %s76, 1
        %s146 = smul.addr %s145, 8
        %s147 = scalar_lea.vmem [#allocation2], %s146
        %p148 = scmp.lt.s32.totalorder %s16, 7
        %s149 = scalar_select %p148, %s16, 7
        %s150 = smul.addr %s149, 8
        %s151 = scalar_lea.vmem %s0, %s150
        %p152 = scmp.lt.s32.totalorder %s16, 7
        %s153 = scalar_select %p152, %s16, 7
        %s154 = smul.addr %s153, 8
        %s155 = scalar_lea.vmem %s1, %s154
        %v156 = vld [vmem:[%s151] sm:$0xff]
        %s157 = smul.u32 %s16, 8
        %v158 = vlaneseq
        %v159 = vshrl.u32 %v158, 7
        %v160 = vstv %s157
        %v161 = vadd.s32 %v160, %v159
        %vm162 = vcmp.lt.s32.totalorder %v161, 64
        %v163 = vsel %vm162, 1, 0
        %vm164 = vcmp.eq.s32.totalorder %v163, 1
        %v165 = vsel %vm164, %v156, 0.0
        %vm166 = vcmask 130048
        %v167 = vsel %vm166, %v165, -inf
        %168 = vmax.xlane.f32.xlu0 %v167
        %v169 = vpop.xlane.xlu0 %168
        %v170 = vsub.f32 %v165, %v169
        %v171 = vmul.f32 %v170, 1.442695
        %v172 = vpow.pop %v171
        %v173 = vsel %vm166, %v172, 0.0
        %174 = vadd.xlane.f32.xlu0 %v173
        %v175 = vpop.xlane.xlu0 %174
        %v176 = vlaneseq
        %v177 = vand.u32 %v176, 127
        %v178 = vld [vmem:[%s155] sm:$0xff]
        %179 = vset.pattern.permute.xlu0 0
        %180 = vperm.xlu0 %179, %v178
        %v181 = vpop.permute.xlu0 %180
        %vm182 = vcmp.eq.s32.totalorder %v177, %v181
        %v183 = vsel %vm182, %v172, 0.0
        %v184 = vsel %vm166, %v183, 0.0
        %185 = vadd.xlane.f32.xlu0 %v184
        %v186 = vpop.xlane.xlu0 %185
        %v187 = vrcp.pop %v175
        %v188 = vmul.f32 %v186, %v187
        %vm189 = vcmp.gt.f32.partialorder %v188, 0.5
        %vm190 = vmand %vm189, %vm162
        %v191 = vmax.f32 %v188, 1e-30
        %v192 = vlog2.pop %v191
        %v193 = vmul.f32 %v192, 0.6931472
        %v194 = vmul.f32 %v193, 0.7
        %v195 = vmul.f32 %v194, 1.442695
        %v196 = vpow.pop %v195
        %v197 = vsub.f32 1.0, %v196
        %v198 = vrcp.pop 0.7
        %v199 = vmul.f32 %v197, %v198
        %v200 = vsel %vm190, %v199, 0.0
        %vm201 = vcmask 7168
        %v202 = vsel %vm201, %v200, 0.0
        %203 = vadd.xlane.f32.xlu0 %v202
        %v204 = vpop.xlane.xlu0 %203
        %v205 = vrot.slane %v204, 4
        %v206 = vadd.f32 %v204, %v205
        %v207 = vrot.slane %v206, 2
        %v208 = vadd.f32 %v206, %v207
        %v209 = vrot.slane %v208, 1
        %v210 = vadd.f32 %v208, %v209
        %s211 = vtos %v210
        %v212 = vsel %vm190, 1, 0
        %v213 = vcvt.s32.f32 %v212
        %v214 = vsel %vm201, %v213, 0.0
        %215 = vadd.xlane.f32.xlu0 %v214
        %v216 = vpop.xlane.xlu0 %215
        %v217 = vrot.slane %v216, 4
        %v218 = vadd.f32 %v216, %v217
        %v219 = vrot.slane %v218, 2
        %v220 = vadd.f32 %v218, %v219
        %v221 = vrot.slane %v220, 1
        %v222 = vadd.f32 %v220, %v221
        %s223 = vtos %v222
        %vm224 = vcmp.eq.s32.totalorder %v159, 0
        %vm225 = vcmp.eq.s32.totalorder %v159, 1
        %v226 = vstv %s223
        %v227 = vsel %vm225, %v226, 0.0
        %v228 = vstv %s211
        %v229 = vsel %vm224, %v228, %v227
        %230 = vst [vmem:[%s147] sm:$0xff] %v229
        %s231 = sand.u32 %s76, 1
        %s232 = scalar_lea.sflag [#allocation3], %s231
        %s233 = sand.u32 %s76, 1
        %s234 = smul.addr %s233, 8
        %s235 = scalar_lea.vmem [#allocation2], %s234
        // Predicated region
        $region29: #{tpu_custom_call.1} parent=27 // pred_check
          %p236 = pneg %p86
        $region30: #{tpu_custom_call.1} parent=27 // pred_check_branch
          %238 = sbr.rel (%p236) target = $region32
        $region31: #{tpu_custom_call.1} parent=27 // pred_region
          %s240 = ssub.s32 128, 128
          %241 = vsyncadd %s232, %s240
          %s242 = smul.addr %s16, 128
          %s243 = scalar_lea.hbm %s2, %s242
          %s245 = sshll.u32 %s235, 4
          %s246 = int_to_ptr.vmem [resolvable:$true] %s245
          %248 = dma.vmem_to_hbm [thread:$0]  %s246, 128, %s243, %s232
        $region32: #{tpu_custom_call.1} parent=27 // pred_fallthru
          _
      $region28: #{tpu_custom_call.1} parent=5 // pred_fallthru
        _
      %p249 = scmp.le.s32.totalorder 2, %s11
      // Predicated region
      $region33: #{tpu_custom_call.1} parent=5 // pred_check
        %p250 = pneg %p249
      $region34: #{tpu_custom_call.1} parent=5 // pred_check_branch
        %252 = sbr.rel (%p250) target = $region36
      $region35: #{tpu_custom_call.1} parent=5 // pred_region
        %s253 = ssub.s32 %s11, 2
        // Predicated region
        $region37: #{tpu_custom_call.1} parent=35 // pred_check
          %p254 = pneg %p92
        $region38: #{tpu_custom_call.1} parent=35 // pred_check_branch
          %256 = sbr.rel (%p254) target = $region40
        $region39: #{tpu_custom_call.1} parent=35 // pred_region
          %s257 = sand.u32 %s77, 1
          %s258 = scalar_lea.sflag [#allocation3], %s257
          %s259 = sand.u32 %s77, 1
          %s260 = smul.addr %s259, 8
          %s261 = scalar_lea.vmem [#allocation2], %s260
          %262 = dma.done %s258, 128
        $region40: #{tpu_custom_call.1} parent=35 // pred_fallthru
          _
      $region36: #{tpu_custom_call.1} parent=5 // pred_fallthru
        _
    $region6: #{tpu_custom_call.1} parent=1 // loop_footer
      %s15 = sadd.s32 1, %s11
    $region7: #{tpu_custom_call.1} parent=1 // loop_footer_branch
      %10 = sbr.rel target = $region3
    $region8: #{tpu_custom_call.1} parent=1 // loop_exit
      _
    %263 = vsyncpa [#allocation3], 1
    %s264 = scalar_lea.sflag [#allocation3], 1
    %265 = vsyncpa %s264, 1

</llo_original>
